<compile_context>
chip_gen: v7x
topology: tpu7x:2x2x1
jax: 0.10.0
libtpu: 0.0.40
codegen_flags: <defaults>
</compile_context>

<pallas_src>
import functools

import jax
import jax.numpy as jnp
from jax import lax
from jax.experimental import pallas as pl
from jax.experimental.pallas import tpu as pltpu

_CHUNK = 256            # lanes per inner step (multiple of 128 -> unmasked stores)
_DEFAULT_BLOCK = 16384  # batch rows per grid step (amortizes ~0.35us/step overhead)


def _round_up(x: int, m: int) -> int:
    return ((x + m - 1) // m) * m


def _mlp_value_kernel(x_ref, w1_ref, w2_ref, w3_ref, out_ref):
    """One grid step of the value MLP; batch is on the lane axis.

    x_ref  : [Qb, D+1, CHUNK]   states slab (last input row is the constant 1)
    w1_ref : [H+1, D+1]         fc1 weight with bias column + ones-passthrough row
    w2_ref : [H+1, H+1]         fc2 weight, same augmentation
    w3_ref : [1,  H+1]          fc3 weight with bias column
    out_ref: [Qb, 1, CHUNK]     lane-dense state values
    """
    n_chunks = x_ref.shape[0]

    # Weights are tiny and VMEM-resident; load once per grid step.
    w1 = w1_ref[...]
    w2 = w2_ref[...]
    w3 = w3_ref[...]

    def body(c, carry):
        x = x_ref[c]                                                     # [D+1, C]
        h1 = jnp.maximum(
            jnp.dot(w1, x, preferred_element_type=jnp.float32), 0.0)     # [H+1, C]
        h2 = jnp.maximum(
            jnp.dot(w2, h1, preferred_element_type=jnp.float32), 0.0)    # [H+1, C]
        y = jnp.dot(w3, h2, preferred_element_type=jnp.float32)          # [1, C]
        out_ref[c] = y.astype(out_ref.dtype)
        return carry

    # unroll=2: two independent chunks in flight hide MXU latency without
    # overflowing the 64-vreg file (~24 live vregs per chunk + weights).
    lax.fori_loop(0, n_chunks, body, 0, unroll=min(n_chunks, 2))


def _augment(w, b, keep_ones_row: bool):
    """Return [out(+1), in+1] weight with bias folded in (and optional ones row)."""
    fan_in, fan_out = w.shape
    rows = fan_out + (1 if keep_ones_row else 0)
    out = jnp.zeros((rows, fan_in + 1), jnp.float32)
    out = out.at[:fan_out, :fan_in].set(w.T)
    out = out.at[:fan_out, fan_in].set(b.reshape(fan_out))
    if keep_ones_row:
        out = out.at[fan_out, fan_in].set(1.0)   # propagates the constant 1
    return out


@functools.partial(jax.jit, static_argnames=("block_rows",))
def v_approx_forward(states, params, *, block_rows: int = _DEFAULT_BLOCK):
    """states: [B, state_dims] float32. Returns state values [B, 1] float32."""
    w1, b1, w2, b2, w3, b3 = params       # weights [in, out], biases [1, out]
    states = jnp.asarray(states, jnp.float32)
    B, D = states.shape

    # Tiling: pad the batch to whole CHUNK-row chunks and whole TB-row grid blocks.
    tb = min(block_rows, _round_up(B, _CHUNK))
    tb = _round_up(tb, _CHUNK)
    padded_b = _round_up(B, tb)
    qb = tb // _CHUNK                      # chunks per grid step
    grid = padded_b // tb

    # Layout plumbing (tiny XLA ops): append the constant-1 input row, put the batch
    # on the lane axis, fold biases into the weights.
    x = jnp.concatenate([states, jnp.ones((B, 1), jnp.float32)], axis=1)  # [B, D+1]
    x = jnp.pad(x, ((0, padded_b - B), (0, 0)))                           # [pB, D+1]
    x = x.reshape(padded_b // _CHUNK, _CHUNK, D + 1).transpose(0, 2, 1)   # [Q, D+1, C]

    w1_k = _augment(w1, b1, keep_ones_row=True)    # [H+1, D+1]
    w2_k = _augment(w2, b2, keep_ones_row=True)    # [H+1, H+1]
    w3_k = _augment(w3, b3, keep_ones_row=False)   # [1,   H+1]

    resident = lambda a: pl.BlockSpec(a.shape, lambda i: (0,) * a.ndim)

    out = pl.pallas_call(
        _mlp_value_kernel,
        out_shape=jax.ShapeDtypeStruct((padded_b // _CHUNK, 1, _CHUNK), jnp.float32),
        grid_spec=pltpu.PrefetchScalarGridSpec(
            num_scalar_prefetch=0,
            grid=(grid,),
            in_specs=[
                pl.BlockSpec((qb, D + 1, _CHUNK), lambda i: (i, 0, 0)),   # states stream
                resident(w1_k),                                           # fc1 (resident)
                resident(w2_k),                                           # fc2 (resident)
                resident(w3_k),                                           # fc3 (resident)
            ],
            out_specs=pl.BlockSpec((qb, 1, _CHUNK), lambda i: (i, 0, 0)),
        ),
        compiler_params=pltpu.CompilerParams(
            dimension_semantics=("parallel",),            # megacore sharding on v7x
            vmem_limit_bytes=32 * 1024 * 1024,
        ),
    )(x, w1_k, w2_k, w3_k)

    return out.reshape(padded_b)[:B].reshape(B, 1)


def init_params(key, state_dims, hidden=32):
    """Deterministic init matching nn.Linear's U(-1/sqrt(fan_in), 1/sqrt(fan_in)).

    Weights are stored as [in, out] (transposed w.r.t. PyTorch's [out, in])."""
    def linear(k, fan_in, fan_out):
        kw, kb = jax.random.split(k)
        bound = 1.0 / jnp.sqrt(jnp.float32(fan_in))
        w = jax.random.uniform(kw, (fan_in, fan_out), jnp.float32, -bound, bound)
        b = jax.random.uniform(kb, (1, fan_out), jnp.float32, -bound, bound)
        return w, b

    k1, k2, k3 = jax.random.split(key, 3)
    w1, b1 = linear(k1, state_dims, hidden)   # fc1: state_dims -> 32
    w2, b2 = linear(k2, hidden, hidden)       # fc2: 32 -> 32
    w3, b3 = linear(k3, hidden, 1)            # fc3: 32 -> 1
    return (w1, b1, w2, b2, w3, b3)


def v_approx_reference(states, params):
    """Pure-JAX reference of the PyTorch forward pass."""
    w1, b1, w2, b2, w3, b3 = params
    x = jnp.maximum(states @ w1 + b1, 0.0)
    x = jnp.maximum(x @ w2 + b2, 0.0)
    return x @ w3 + b3

# TODO(synk): update() (Adam optimizer + MSE backward) is training-side logic and is
# not part of the forward-pass kernel.


if __name__ == "__main__":
    key = jax.random.PRNGKey(0)
    k_params, k_small, k_large = jax.random.split(key, 3)

    state_dims = 4     # CartPole-like observation size
    params = init_params(k_params, state_dims)

    # Small smoke test: single grid block, single chunk.
    states = jax.random.normal(k_small, (8, state_dims), jnp.float32)
    out = jax.block_until_ready(v_approx_forward(states, params))
    ref = v_approx_reference(states, params)
    assert out.shape == (8, 1), out.shape
    assert float(jnp.max(jnp.abs(out - ref))) < 1e-4, (out, ref)

    # Ragged batch: exercises padding, a 2-block grid, resident weights, and the
    # unroll-by-2 in-kernel chunk loop (16 chunks per block).
    states_big = jax.random.normal(k_large, (5000, state_dims), jnp.float32)
    out_big = jax.block_until_ready(
        v_approx_forward(states_big, params, block_rows=4096))
    ref_big = v_approx_reference(states_big, params)
    assert out_big.shape == (5000, 1), out_big.shape
    assert float(jnp.max(jnp.abs(out_big - ref_big))) < 1e-4

    print("KERNEL_OK")
</pallas_src>

<mosaic_0001>
module attributes {stable_mosaic.version = 11 : i64} {
  func.func @_mlp_value_kernel(%arg0: i32, %arg1: memref<1x5x256xf32, #tpu.memory_space<vmem>>, %arg2: memref<33x5xf32, #tpu.memory_space<vmem>>, %arg3: memref<33x33xf32, #tpu.memory_space<vmem>>, %arg4: memref<1x33xf32, #tpu.memory_space<vmem>>, %arg5: memref<1x1x256xf32, #tpu.memory_space<vmem>>) attributes {dimension_semantics = [#tpu.dimension_semantics<parallel>], iteration_bounds = array<i64: 1>, scalar_prefetch = 0 : i64, scratch_operands = 0 : i64, tpu.core_type = #tpu.core_type<tc>, window_params = [{transform_indices = @transform_0, window_bounds = array<i64: 1, 5, 256>}, {pipeline_mode = #tpu.pipeline_mode<synchronous>, transform_indices = @transform_1, window_bounds = array<i64: 33, 5>}, {pipeline_mode = #tpu.pipeline_mode<synchronous>, transform_indices = @transform_2, window_bounds = array<i64: 33, 33>}, {pipeline_mode = #tpu.pipeline_mode<synchronous>, transform_indices = @transform_3, window_bounds = array<i64: 1, 33>}, {transform_indices = @transform_4, window_bounds = array<i64: 1, 1, 256>}]} {
    %c0 = arith.constant 0 : index
    %c0_0 = arith.constant 0 : index
    %0 = vector.load %arg2[%c0, %c0_0] : memref<33x5xf32, #tpu.memory_space<vmem>>, vector<33x5xf32>
    %c0_1 = arith.constant 0 : index
    %c0_2 = arith.constant 0 : index
    %1 = vector.load %arg3[%c0_1, %c0_2] : memref<33x33xf32, #tpu.memory_space<vmem>>, vector<33x33xf32>
    %c0_3 = arith.constant 0 : index
    %c0_4 = arith.constant 0 : index
    %2 = vector.load %arg4[%c0_3, %c0_4] : memref<1x33xf32, #tpu.memory_space<vmem>>, vector<1x33xf32>
    %c0_i32 = arith.constant 0 : i32
    %3 = arith.index_cast %c0_i32 : i32 to index
    %c0_5 = arith.constant 0 : index
    %c0_6 = arith.constant 0 : index
    %4 = vector.load %arg1[%3, %c0_5, %c0_6] : memref<1x5x256xf32, #tpu.memory_space<vmem>>, vector<1x5x256xf32>
    %5 = vector.shape_cast %4 : vector<1x5x256xf32> to vector<5x256xf32>
    %cst = arith.constant dense<0.000000e+00> : vector<33x256xf32>
    %6 = tpu.matmul %0, %5, %cst {dimension_numbers = #tpu.dot_dimension_numbers<[1], [0], [0], [1], [0, 0, 1, 1], [], []>} : vector<33x5xf32>, vector<5x256xf32>, vector<33x256xf32> -> vector<33x256xf32>
    %cst_7 = arith.constant 0.000000e+00 : f32
    %7 = vector.broadcast %cst_7 : f32 to vector<33x256xf32>
    %8 = arith.maximumf %6, %7 : vector<33x256xf32>
    %cst_8 = arith.constant dense<0.000000e+00> : vector<33x256xf32>
    %9 = tpu.matmul %1, %8, %cst_8 {dimension_numbers = #tpu.dot_dimension_numbers<[1], [0], [0], [1], [0, 0, 1, 1], [], []>} : vector<33x33xf32>, vector<33x256xf32>, vector<33x256xf32> -> vector<33x256xf32>
    %cst_9 = arith.constant 0.000000e+00 : f32
    %10 = vector.broadcast %cst_9 : f32 to vector<33x256xf32>
    %11 = arith.maximumf %9, %10 : vector<33x256xf32>
    %cst_10 = arith.constant dense<0.000000e+00> : vector<1x256xf32>
    %12 = tpu.matmul %2, %11, %cst_10 {dimension_numbers = #tpu.dot_dimension_numbers<[1], [0], [0], [1], [0, 0, 1, 1], [], []>} : vector<1x33xf32>, vector<33x256xf32>, vector<1x256xf32> -> vector<1x256xf32>
    %13 = arith.index_cast %c0_i32 : i32 to index
    %c0_11 = arith.constant 0 : index
    %c0_12 = arith.constant 0 : index
    %14 = vector.load %arg5[%13, %c0_11, %c0_12] : memref<1x1x256xf32, #tpu.memory_space<vmem>>, vector<1x1x256xf32>
    %15 = vector.shape_cast %14 : vector<1x1x256xf32> to vector<1x256xf32>
    %16 = vector.shape_cast %12 : vector<1x256xf32> to vector<1x1x256xf32>
    tpu.vector_store %arg5[%13, %c0_11, %c0_12], %16 {strides = array<i32>} : memref<1x1x256xf32, #tpu.memory_space<vmem>>, vector<1x1x256xf32>,
    %c1_i32 = arith.constant 1 : i32
    return
  }
  func.func @transform_0(%arg0: i32) -> (i32, i32, i32) {
    %c0_i32 = arith.constant 0 : i32
    %c0_i32_0 = arith.constant 0 : i32
    %c0_i32_1 = arith.constant 0 : i32
    return %arg0, %c0_i32, %c0_i32_0 : i32, i32, i32
  }
  func.func @transform_1(%arg0: i32) -> (i32, i32) {
    %c0_i32 = arith.constant 0 : i32
    %c0_i32_0 = arith.constant 0 : i32
    %c0_i32_1 = arith.constant 0 : i32
    return %c0_i32, %c0_i32_0 : i32, i32
  }
  func.func @transform_2(%arg0: i32) -> (i32, i32) {
    %c0_i32 = arith.constant 0 : i32
    %c0_i32_0 = arith.constant 0 : i32
    %c0_i32_1 = arith.constant 0 : i32
    return %c0_i32, %c0_i32_0 : i32, i32
  }
  func.func @transform_3(%arg0: i32) -> (i32, i32) {
    %c0_i32 = arith.constant 0 : i32
    %c0_i32_0 = arith.constant 0 : i32
    %c0_i32_1 = arith.constant 0 : i32
    return %c0_i32, %c0_i32_0 : i32, i32
  }
  func.func @transform_4(%arg0: i32) -> (i32, i32, i32) {
    %c0_i32 = arith.constant 0 : i32
    %c0_i32_0 = arith.constant 0 : i32
    %c0_i32_1 = arith.constant 0 : i32
    return %arg0, %c0_i32, %c0_i32_0 : i32, i32, i32
  }
}

</mosaic_0001>

<llo_original>
// kernel: v_approx_forward.1
$region0: #{v_approx_forward.1}
  #allocation0 [shape = 'u32[]', space=smem, size = 0x4, offset = 0x4, fixed_abs, tag = 'smem constant byte address 0x4 - core index']
  #allocation1 [shape = 'u32[144,128]{1,0:T(1,128)}', space=vmem, size = 0x12000, scoped, tag = 'internal scratch']
  %s0 = inlined_call_operand.vmem [shape: f32[1,5,256], index: 0, kind: input, shape index: {}]
  %s1 = inlined_call_operand.vmem [shape: f32[33,5], index: 1, kind: input, shape index: {}]
  %s2 = inlined_call_operand.vmem [shape: f32[33,33], index: 2, kind: input, shape index: {}]
  %s3 = inlined_call_operand.vmem [shape: f32[1,33], index: 3, kind: input, shape index: {}]
  %s4 = inlined_call_operand.vmem [shape: f32[1,1,256], index: 4, kind: output, shape index: {}]
  %s5 = sld [smem:[#allocation0]]
  $region26: #{v_approx_forward.1} parent=0
    _
  %s7 = ssub.s32 1, %s5
  %s8 = scalar_select 0, %s7, %s5
  // Predicated region
  $region2: #{v_approx_forward.1} parent=0 // pred_check
    _
  $region3: #{v_approx_forward.1} parent=0 // pred_check_branch
    %10 = sbr.rel (0) target = $region5
  $region4: #{v_approx_forward.1} parent=0 // pred_region
    _
  $region5: #{v_approx_forward.1} parent=0 // pred_fallthru
    _
  // Predicated region
  $region6: #{v_approx_forward.1} parent=0 // pred_check
    _
  $region7: #{v_approx_forward.1} parent=0 // pred_check_branch
    %12 = sbr.rel (0) target = $region9
  $region8: #{v_approx_forward.1} parent=0 // pred_region
    _
  $region9: #{v_approx_forward.1} parent=0 // pred_fallthru
    _
  // Predicated region
  $region10: #{v_approx_forward.1} parent=0 // pred_check
    _
  $region11: #{v_approx_forward.1} parent=0 // pred_check_branch
    %14 = sbr.rel (0) target = $region13
  $region12: #{v_approx_forward.1} parent=0 // pred_region
    _
  $region13: #{v_approx_forward.1} parent=0 // pred_fallthru
    _
  // Predicated region
  $region14: #{v_approx_forward.1} parent=0 // pred_check
    _
  $region15: #{v_approx_forward.1} parent=0 // pred_check_branch
    %16 = sbr.rel (0) target = $region17
  $region16: #{v_approx_forward.1} parent=0 // pred_region
    _
  $region17: #{v_approx_forward.1} parent=0 // pred_fallthru
    _
  %v17 = vld [vmem:[%s1] sm:$0xff]
  %v18 = vld [vmem:[%s1 + $0x8] sm:$0xff]
  %v19 = vld [vmem:[%s1 + $0x10] sm:$0xff]
  %v20 = vld [vmem:[%s1 + $0x18] sm:$0xff]
  %v21 = vld [vmem:[%s1 + $0x20] sm:$0x1]
  %v22 = vld [vmem:[%s2] sm:$0xff]
  %v23 = vld [vmem:[%s2 + $0x8] sm:$0xff]
  %v24 = vld [vmem:[%s2 + $0x10] sm:$0xff]
  %v25 = vld [vmem:[%s2 + $0x18] sm:$0xff]
  %v26 = vld [vmem:[%s2 + $0x20] sm:$0x1]
  %v27 = vld [vmem:[%s3] sm:$0x1]
  %v28 = vld [vmem:[%s0] sm:$0x1f]
  %v29 = vld [vmem:[%s0 + $0x8] sm:$0x1f]
  %vm30 = vcmask 39936
  %v32 = vsel %vm30, %v17, 0
  %v35 = vsel %vm30, %v18, 0
  %v38 = vsel %vm30, %v19, 0
  %v41 = vsel %vm30, %v20, 0
  %v44 = vsel %vm30, %v21, 0
  %vm46 = vcmask 1044480
  %v48 = vsel %vm46, %v28, 0
  %v51 = vsel %vm46, %v29, 0
  %53 = vmatprep.subr.mxu0 %v51
  %54 = vmatpush1.msra.mxu0 %v48
  %55 = vmatprep.subr.mxu0 0.0
  %56 = vmatpush1.msra.mxu0 0.0
  %57 = vmatprep.subr.mxu0 0.0
  %58 = vmatpush1.msra.mxu0 0.0
  %59 = vmatprep.subr.mxu0 0.0
  %60 = vmatpush1.msra.mxu0 0.0
  %61 = vmatprep.subr.mxu0 0.0
  %62 = vmatpush1.msra.mxu0 0.0
  %63 = vmatprep.subr.mxu0 0.0
  %64 = vmatpush1.msra.mxu0 0.0
  %65 = vmatprep.subr.mxu0 0.0
  %66 = vmatpush1.msra.mxu0 0.0
  %67 = vmatprep.subr.mxu0 0.0
  %68 = vmatpush1.msra.mxu0 0.0
  %69 = vmatprep.subr.mxu0 0.0
  %70 = vmatpush1.msra.mxu0 0.0
  %71 = vmatprep.subr.mxu0 0.0
  %72 = vmatpush1.msra.mxu0 0.0
  %73 = vmatprep.subr.mxu0 0.0
  %74 = vmatpush1.msra.mxu0 0.0
  %75 = vmatprep.subr.mxu0 0.0
  %76 = vmatpush1.msra.mxu0 0.0
  %77 = vmatprep.subr.mxu0 0.0
  %78 = vmatpush1.msra.mxu0 0.0
  %79 = vmatprep.subr.mxu0 0.0
  %80 = vmatpush1.msra.mxu0 0.0
  %81 = vmatprep.subr.mxu0 0.0
  %82 = vmatpush1.msra.mxu0 0.0
  %83 = vmatprep.subr.mxu0 0.0
  %84 = vmatpush1.msra.mxu0 0.0
  %85 = vmatprep.subr.mxu0 0.0
  %86 = vmatpush1.msra.mxu0 0.0
  %87 = vmatprep.subr.mxu0 0.0
  %88 = vmatpush1.msra.mxu0 0.0
  %89 = vmatprep.subr.mxu0 0.0
  %90 = vmatpush1.msra.mxu0 0.0
  %91 = vmatprep.subr.mxu0 0.0
  %92 = vmatpush1.msra.mxu0 0.0
  %93 = vmatprep.subr.mxu0 0.0
  %94 = vmatpush1.msra.mxu0 0.0
  %95 = vmatprep.subr.mxu0 0.0
  %96 = vmatpush1.msra.mxu0 0.0
  %97 = vmatprep.subr.mxu0 0.0
  %98 = vmatpush1.msra.mxu0 0.0
  %99 = vmatprep.subr.mxu0 0.0
  %100 = vmatpush1.msra.mxu0 0.0
  %101 = vmatprep.subr.mxu0 0.0
  %102 = vmatpush1.msra.mxu0 0.0
  %103 = vmatprep.subr.mxu0 0.0
  %104 = vmatpush1.msra.mxu0 0.0
  %105 = vmatprep.subr.mxu0 0.0
  %106 = vmatpush1.msra.mxu0 0.0
  %107 = vmatprep.subr.mxu0 0.0
  %108 = vmatpush1.msra.mxu0 0.0
  %109 = vmatprep.subr.mxu0 0.0
  %110 = vmatpush1.msra.mxu0 0.0
  %111 = vmatprep.subr.mxu0 0.0
  %112 = vmatpush1.msra.mxu0 0.0
  %113 = vmatprep.subr.mxu0 0.0
  %114 = vmatpush1.msra.mxu0 0.0
  %115 = vmatprep.subr.mxu0 0.0
  %116 = vmatpush1.msra.mxu0 0.0
  %117 = vmatprep.mubr.f32.mxu0 0.0
  %118 = vmatmul.mubr.f32.gmra.mrb[0].mxu0 %v32
  %v119 = vpop.f32.mrb[0].mxu0
  %v120 = vadd.f32 0.0, %v119
  %v121 = vpop.f32.mrb[0].mxu0
  %v122 = vadd.f32 0.0, %v121
  %123 = vmatprep.mubr.f32.mxu0 0.0
  %124 = vmatmul.mubr.f32.gmra.mrb[0].mxu0 %v35
  %v125 = vpop.f32.mrb[0].mxu0
  %v126 = vadd.f32 0.0, %v125
  %v127 = vpop.f32.mrb[0].mxu0
  %v128 = vadd.f32 0.0, %v127
  %129 = vmatprep.mubr.f32.mxu0 0.0
  %130 = vmatmul.mubr.f32.gmra.mrb[0].mxu0 %v38
  %v131 = vpop.f32.mrb[0].mxu0
  %v132 = vadd.f32 0.0, %v131
  %v133 = vpop.f32.mrb[0].mxu0
  %v134 = vadd.f32 0.0, %v133
  %135 = vmatprep.mubr.f32.mxu0 0.0
  %136 = vmatmul.mubr.f32.gmra.mrb[0].mxu0 %v41
  %v137 = vpop.f32.mrb[0].mxu0
  %v138 = vadd.f32 0.0, %v137
  %v139 = vpop.f32.mrb[0].mxu0
  %v140 = vadd.f32 0.0, %v139
  %141 = vmatprep.mubr.f32.mxu0 0.0
  %142 = vmatmul.mubr.f32.gmra.mrb[0].mxu0 %v44
  %v143 = vpop.f32.mrb[0].mxu0
  %v144 = vadd.f32 0.0, %v143
  %v145 = vpop.f32.mrb[0].mxu0
  %v146 = vadd.f32 0.0, %v145
  %147 = vdwg.mxu0
  %v148 = vmax.f32 %v120, 0.0
  %v149 = vmax.f32 %v122, 0.0
  %v150 = vmax.f32 %v126, 0.0
  %v151 = vmax.f32 %v128, 0.0
  %v152 = vmax.f32 %v132, 0.0
  %v153 = vmax.f32 %v134, 0.0
  %v154 = vmax.f32 %v138, 0.0
  %v155 = vmax.f32 %v140, 0.0
  %v156 = vmax.f32 %v144, 0.0
  %v157 = vmax.f32 %v146, 0.0
  %vm158 = vcmask 269312
  %v160 = vsel %vm158, %v22, 0
  %v163 = vsel %vm158, %v23, 0
  %v166 = vsel %vm158, %v24, 0
  %v169 = vsel %vm158, %v25, 0
  %v172 = vsel %vm158, %v26, 0
  %vm174 = vcmask 1040384
  %v176 = vsel %vm174, %v156, 0
  %v179 = vsel %vm174, %v157, 0
  %181 = vmatprep.subr.mxu0 %v149
  %182 = vmatpush1.msra.mxu0 %v148
  %183 = vmatprep.subr.mxu0 %v151
  %184 = vmatpush1.msra.mxu0 %v150
  %185 = vmatprep.subr.mxu0 %v153
  %186 = vmatpush1.msra.mxu0 %v152
  %187 = vmatprep.subr.mxu0 %v155
  %188 = vmatpush1.msra.mxu0 %v154
  %189 = vmatprep.subr.mxu0 %v179
  %190 = vmatpush1.msra.mxu0 %v176
  %191 = vmatprep.subr.mxu0 0.0
  %192 = vmatpush1.msra.mxu0 0.0
  %193 = vmatprep.subr.mxu0 0.0
  %194 = vmatpush1.msra.mxu0 0.0
  %195 = vmatprep.subr.mxu0 0.0
  %196 = vmatpush1.msra.mxu0 0.0
  %197 = vmatprep.subr.mxu0 0.0
  %198 = vmatpush1.msra.mxu0 0.0
  %199 = vmatprep.subr.mxu0 0.0
  %200 = vmatpush1.msra.mxu0 0.0
  %201 = vmatprep.subr.mxu0 0.0
  %202 = vmatpush1.msra.mxu0 0.0
  %203 = vmatprep.subr.mxu0 0.0
  %204 = vmatpush1.msra.mxu0 0.0
  %205 = vmatprep.subr.mxu0 0.0
  %206 = vmatpush1.msra.mxu0 0.0
  %207 = vmatprep.subr.mxu0 0.0
  %208 = vmatpush1.msra.mxu0 0.0
  %209 = vmatprep.subr.mxu0 0.0
  %210 = vmatpush1.msra.mxu0 0.0
  %211 = vmatprep.subr.mxu0 0.0
  %212 = vmatpush1.msra.mxu0 0.0
  %213 = vmatprep.subr.mxu0 0.0
  %214 = vmatpush1.msra.mxu0 0.0
  %215 = vmatprep.subr.mxu0 0.0
  %216 = vmatpush1.msra.mxu0 0.0
  %217 = vmatprep.subr.mxu0 0.0
  %218 = vmatpush1.msra.mxu0 0.0
  %219 = vmatprep.subr.mxu0 0.0
  %220 = vmatpush1.msra.mxu0 0.0
  %221 = vmatprep.subr.mxu0 0.0
  %222 = vmatpush1.msra.mxu0 0.0
  %223 = vmatprep.subr.mxu0 0.0
  %224 = vmatpush1.msra.mxu0 0.0
  %225 = vmatprep.subr.mxu0 0.0
  %226 = vmatpush1.msra.mxu0 0.0
  %227 = vmatprep.subr.mxu0 0.0
  %228 = vmatpush1.msra.mxu0 0.0
  %229 = vmatprep.subr.mxu0 0.0
  %230 = vmatpush1.msra.mxu0 0.0
  %231 = vmatprep.subr.mxu0 0.0
  %232 = vmatpush1.msra.mxu0 0.0
  %233 = vmatprep.subr.mxu0 0.0
  %234 = vmatpush1.msra.mxu0 0.0
  %235 = vmatprep.subr.mxu0 0.0
  %236 = vmatpush1.msra.mxu0 0.0
  %237 = vmatprep.subr.mxu0 0.0
  %238 = vmatpush1.msra.mxu0 0.0
  %239 = vmatprep.subr.mxu0 0.0
  %240 = vmatpush1.msra.mxu0 0.0
  %241 = vmatprep.subr.mxu0 0.0
  %242 = vmatpush1.msra.mxu0 0.0
  %243 = vmatprep.subr.mxu0 0.0
  %244 = vmatpush1.msra.mxu0 0.0
  %245 = vmatprep.mubr.f32.mxu0 0.0
  %246 = vmatmul.mubr.f32.gmra.mrb[0].mxu0 %v160
  %v247 = vpop.f32.mrb[0].mxu0
  %v248 = vadd.f32 0.0, %v247
  %v249 = vpop.f32.mrb[0].mxu0
  %v250 = vadd.f32 0.0, %v249
  %251 = vmatprep.mubr.f32.mxu0 0.0
  %252 = vmatmul.mubr.f32.gmra.mrb[0].mxu0 %v163
  %v253 = vpop.f32.mrb[0].mxu0
  %v254 = vadd.f32 0.0, %v253
  %v255 = vpop.f32.mrb[0].mxu0
  %v256 = vadd.f32 0.0, %v255
  %257 = vmatprep.mubr.f32.mxu0 0.0
  %258 = vmatmul.mubr.f32.gmra.mrb[0].mxu0 %v166
  %v259 = vpop.f32.mrb[0].mxu0
  %v260 = vadd.f32 0.0, %v259
  %v261 = vpop.f32.mrb[0].mxu0
  %v262 = vadd.f32 0.0, %v261
  %263 = vmatprep.mubr.f32.mxu0 0.0
  %264 = vmatmul.mubr.f32.gmra.mrb[0].mxu0 %v169
  %v265 = vpop.f32.mrb[0].mxu0
  %v266 = vadd.f32 0.0, %v265
  %v267 = vpop.f32.mrb[0].mxu0
  %v268 = vadd.f32 0.0, %v267
  %269 = vmatprep.mubr.f32.mxu0 0.0
  %270 = vmatmul.mubr.f32.gmra.mrb[0].mxu0 %v172
  %v271 = vpop.f32.mrb[0].mxu0
  %v272 = vadd.f32 0.0, %v271
  %v273 = vpop.f32.mrb[0].mxu0
  %v274 = vadd.f32 0.0, %v273
  %275 = vdwg.mxu0
  %v276 = vmax.f32 %v248, 0.0
  %v277 = vmax.f32 %v250, 0.0
  %v278 = vmax.f32 %v254, 0.0
  %v279 = vmax.f32 %v256, 0.0
  %v280 = vmax.f32 %v260, 0.0
  %v281 = vmax.f32 %v262, 0.0
  %v282 = vmax.f32 %v266, 0.0
  %v283 = vmax.f32 %v268, 0.0
  %v284 = vmax.f32 %v272, 0.0
  %v285 = vmax.f32 %v274, 0.0
  %v287 = vsel %vm158, %v27, 0
  %v290 = vsel %vm174, %v284, 0
  %v293 = vsel %vm174, %v285, 0
  %295 = vmatprep.subr.mxu0 %v277
  %296 = vmatpush1.msra.mxu0 %v276
  %297 = vmatprep.subr.mxu0 %v279
  %298 = vmatpush1.msra.mxu0 %v278
  %299 = vmatprep.subr.mxu0 %v281
  %300 = vmatpush1.msra.mxu0 %v280
  %301 = vmatprep.subr.mxu0 %v283
  %302 = vmatpush1.msra.mxu0 %v282
  %303 = vmatprep.subr.mxu0 %v293
  %304 = vmatpush1.msra.mxu0 %v290
  %305 = vmatprep.subr.mxu0 0.0
  %306 = vmatpush1.msra.mxu0 0.0
  %307 = vmatprep.subr.mxu0 0.0
  %308 = vmatpush1.msra.mxu0 0.0
  %309 = vmatprep.subr.mxu0 0.0
  %310 = vmatpush1.msra.mxu0 0.0
  %311 = vmatprep.subr.mxu0 0.0
  %312 = vmatpush1.msra.mxu0 0.0
  %313 = vmatprep.subr.mxu0 0.0
  %314 = vmatpush1.msra.mxu0 0.0
  %315 = vmatprep.subr.mxu0 0.0
  %316 = vmatpush1.msra.mxu0 0.0
  %317 = vmatprep.subr.mxu0 0.0
  %318 = vmatpush1.msra.mxu0 0.0
  %319 = vmatprep.subr.mxu0 0.0
  %320 = vmatpush1.msra.mxu0 0.0
  %321 = vmatprep.subr.mxu0 0.0
  %322 = vmatpush1.msra.mxu0 0.0
  %323 = vmatprep.subr.mxu0 0.0
  %324 = vmatpush1.msra.mxu0 0.0
  %325 = vmatprep.subr.mxu0 0.0
  %326 = vmatpush1.msra.mxu0 0.0
  %327 = vmatprep.subr.mxu0 0.0
  %328 = vmatpush1.msra.mxu0 0.0
  %329 = vmatprep.subr.mxu0 0.0
  %330 = vmatpush1.msra.mxu0 0.0
  %331 = vmatprep.subr.mxu0 0.0
  %332 = vmatpush1.msra.mxu0 0.0
  %333 = vmatprep.subr.mxu0 0.0
  %334 = vmatpush1.msra.mxu0 0.0
  %335 = vmatprep.subr.mxu0 0.0
  %336 = vmatpush1.msra.mxu0 0.0
  %337 = vmatprep.subr.mxu0 0.0
  %338 = vmatpush1.msra.mxu0 0.0
  %339 = vmatprep.subr.mxu0 0.0
  %340 = vmatpush1.msra.mxu0 0.0
  %341 = vmatprep.subr.mxu0 0.0
  %342 = vmatpush1.msra.mxu0 0.0
  %343 = vmatprep.subr.mxu0 0.0
  %344 = vmatpush1.msra.mxu0 0.0
  %345 = vmatprep.subr.mxu0 0.0
  %346 = vmatpush1.msra.mxu0 0.0
  %347 = vmatprep.subr.mxu0 0.0
  %348 = vmatpush1.msra.mxu0 0.0
  %349 = vmatprep.subr.mxu0 0.0
  %350 = vmatpush1.msra.mxu0 0.0
  %351 = vmatprep.subr.mxu0 0.0
  %352 = vmatpush1.msra.mxu0 0.0
  %353 = vmatprep.subr.mxu0 0.0
  %354 = vmatpush1.msra.mxu0 0.0
  %355 = vmatprep.subr.mxu0 0.0
  %356 = vmatpush1.msra.mxu0 0.0
  %357 = vmatprep.subr.mxu0 0.0
  %358 = vmatpush1.msra.mxu0 0.0
  %359 = vmatprep.mubr.f32.mxu0 0.0
  %360 = vmatmul.mubr.f32.gmra.mrb[0].mxu0 %v287
  %v361 = vpop.f32.mrb[0].mxu0
  %v362 = vadd.f32 0.0, %v361
  %v363 = vpop.f32.mrb[0].mxu0
  %v364 = vadd.f32 0.0, %v363
  %365 = vdwg.mxu0
  %v368 = vcombine.low %v362, %v364
  %v370 = vunpack.c.l.s4 1966171168
  %v371 = vunpack.c.0.s8 %v370
  %v372 = vlaneseq
  %v373 = vshrl.u32 %v372, 7
  %v374 = vsub.s32 %v371, %v373
  %v375 = vrot.slane %v368, %v374
  %v377 = vunpack.c.l.s4 1966171168
  %v378 = vunpack.c.0.s8 %v377
  %v379 = vlaneseq
  %v380 = vshrl.u32 %v379, 7
  %v381 = vsub.s32 %v378, %v380
  %v382 = vrot.slane %v375, %v381
  %v384 = vlaneseq
  %vm385 = vcmp.ge.s32.totalorder %v384, 0
  %vm386 = vcmp.lt.s32.totalorder %v384, 256
  %vm387 = vmand %vm385, %vm386
  %388 = vst.msk [vmem:[%s4] sm:$0x3] %vm387, %v382
  // Predicated region
  $region18: #{v_approx_forward.1} parent=0 // pred_check
    _
  $region19: #{v_approx_forward.1} parent=0 // pred_check_branch
    %390 = sbr.rel (0) target = $region21
  $region20: #{v_approx_forward.1} parent=0 // pred_region
    _
  $region21: #{v_approx_forward.1} parent=0 // pred_fallthru
    _
  // Predicated region
  $region22: #{v_approx_forward.1} parent=0 // pred_check
    _
  $region23: #{v_approx_forward.1} parent=0 // pred_check_branch
    %392 = sbr.rel (0) target = $region25
  $region24: #{v_approx_forward.1} parent=0 // pred_region
    _
  $region25: #{v_approx_forward.1} parent=0 // pred_fallthru
    _

</llo_original>
